<compile_context>
chip_gen: v7x
topology: tpu7x:2x2x1
jax: 0.10.0
libtpu: 0.0.40
codegen_flags: <defaults>
</compile_context>

<pallas_src>
import jax
import jax.numpy as jnp
from jax.experimental import pallas as pl
from jax.experimental.pallas import tpu as pltpu

COORD_W = 5.0
NOOBJ_W = 0.5
LANE = 128
NCH = 30


def _round_up(x, n):
    return ((x + n - 1) // n) * n


def _iou_ch(ax, ay, aw, ah, bx, by, bw, bh):
    """Midpoint-format IoU, channel-wise on (tile_r, 128) slabs."""
    a_x1 = ax - aw * 0.5
    a_y1 = ay - ah * 0.5
    a_x2 = ax + aw * 0.5
    a_y2 = ay + ah * 0.5
    b_x1 = bx - bw * 0.5
    b_y1 = by - bh * 0.5
    b_x2 = bx + bw * 0.5
    b_y2 = by + bh * 0.5
    inter_w = jnp.maximum(jnp.minimum(a_x2, b_x2) - jnp.maximum(a_x1, b_x1), 0.0)
    inter_h = jnp.maximum(jnp.minimum(a_y2, b_y2) - jnp.maximum(a_y1, b_y1), 0.0)
    inter = inter_w * inter_h
    area_a = jnp.abs((a_x2 - a_x1) * (a_y2 - a_y1))
    area_b = jnp.abs((b_x2 - b_x1) * (b_y2 - b_y1))
    return inter / (area_a + area_b - inter + 1e-6)


def _make_kernel(m_cells, tile_r):
    def kernel(pred_ref, tgt_ref, out_ref):
        # pred_ref/tgt_ref: (30, tile_r, 128) f32 in VMEM
        # out_ref:          (1, 8, 128) f32 -> per-block partial sums in
        #                   sublane rows 0..3 (coord, obj, noobj, class).
        # Channel groups read directly as ref views (major-axis slices: free).
        pb1 = pred_ref[21:25, :, :]       # pred box 1: x, y, w, h
        pb2 = pred_ref[26:30, :, :]       # pred box 2
        pc1 = pred_ref[20]                # pred confidence 1  (tile_r, 128)
        pc2 = pred_ref[25]                # pred confidence 2
        pcls = pred_ref[0:20, :, :]       # pred class scores
        tb = tgt_ref[21:25, :, :]         # target box
        tobj = tgt_ref[20]                # target objectness (= box mask)
        tcls = tgt_ref[0:20, :, :]        # target class scores

        iou1 = _iou_ch(pb1[0], pb1[1], pb1[2], pb1[3],
                       tb[0], tb[1], tb[2], tb[3])
        iou2 = _iou_ch(pb2[0], pb2[1], pb2[2], pb2[3],
                       tb[0], tb[1], tb[2], tb[3])

        # torch.max over stacked [iou1, iou2] tie-breaks to index 0, so box 2
        # is "responsible" only when its IoU is strictly greater.
        resp = (iou2 > iou1).astype(jnp.float32)          # (tile_r, 128)
        mask = tobj

        respb = resp[None]                                 # (1, tile_r, 128)
        maskb = mask[None]
        bp = maskb * (respb * pb2 + (1.0 - respb) * pb1)   # (4, tile_r, 128)
        bt = maskb * tb

        # Validity mask for zero-padded cells: without it each padded cell
        # would add (sqrt(1e-6))^2 per w/h to the coord term.
        base = pl.program_id(0) * (tile_r * LANE)
        row = jax.lax.broadcasted_iota(jnp.int32, (tile_r, LANE), 0)
        lane = jax.lax.broadcasted_iota(jnp.int32, (tile_r, LANE), 1)
        valid = ((base + row * LANE + lane) < m_cells).astype(jnp.float32)

        # coord (unweighted)
        xy_sq = (bp[0] - bt[0]) ** 2 + (bp[1] - bt[1]) ** 2
        wh_p = jnp.sqrt(jnp.clip(bp[2:4] + 1e-6, 0.0, 1.0))
        wh_t = jnp.sqrt(bt[2:4])
        wh_sq = (wh_p[0] - wh_t[0]) ** 2 + (wh_p[1] - wh_t[1]) ** 2
        coord_s = jnp.sum(valid * (xy_sq + wh_sq))

        # object
        pred_conf = resp * pc2 + (1.0 - resp) * pc1
        obj_s = jnp.sum((mask * pred_conf - mask * tobj) ** 2)

        # no-object (unweighted)
        inv = 1.0 - mask
        noobj_s = (jnp.sum((inv * pc1 - inv * tobj) ** 2)
                   + jnp.sum((inv * pc2 - inv * tobj) ** 2))

        # class (leading-axis reduce = vreg adds, then one cross-lane reduce)
        cls_sq = (maskb * pcls - maskb * tcls) ** 2
        cls_s = jnp.sum(jnp.sum(cls_sq, axis=0))

        # Pack the 4 partial sums into sublane rows 0..3 of a dense
        # (8, 128) slab and store the whole block at once.
        ridx = jax.lax.broadcasted_iota(jnp.int32, (8, LANE), 0)
        part = (jnp.where(ridx == 0, coord_s, 0.0)
                + jnp.where(ridx == 1, obj_s, 0.0)
                + jnp.where(ridx == 2, noobj_s, 0.0)
                + jnp.where(ridx == 3, cls_s, 0.0))
        out_ref[...] = part[None].astype(jnp.float32)

    return kernel


def yolo_loss(predictions, target, *, max_tile_rows=128):
    """predictions: (B, 1470) or (B, 7, 7, 30); target: (B, 7, 7, 30)."""
    pred = jnp.asarray(predictions, jnp.float32).reshape(-1, 7, 7, 30)
    tgt = jnp.asarray(target, jnp.float32).reshape(pred.shape)
    m = pred.shape[0] * 49

    rows = -(-m // LANE)                               # ceil(m / 128)
    tile_r = min(max_tile_rows, _round_up(rows, 8))    # multiple of 8 sublanes
    rows_pad = _round_up(rows, tile_r)
    m_pad = rows_pad * LANE
    num_blocks = rows_pad // tile_r

    def to_slab(x):
        x2 = x.reshape(m, NCH)
        x2 = jnp.pad(x2, ((0, m_pad - m), (0, 0)))
        # Lane-dense layout: channels -> major axis, cells -> (sublane, lane).
        return jnp.transpose(x2, (1, 0)).reshape(NCH, rows_pad, LANE)

    partials = pl.pallas_call(
        _make_kernel(m, tile_r),
        out_shape=jax.ShapeDtypeStruct((num_blocks, 8, LANE), jnp.float32),
        grid=(num_blocks,),
        in_specs=[pl.BlockSpec((NCH, tile_r, LANE), lambda i: (0, i, 0)),
                  pl.BlockSpec((NCH, tile_r, LANE), lambda i: (0, i, 0))],
        out_specs=pl.BlockSpec((1, 8, LANE), lambda i: (i, 0, 0)),
        compiler_params=pltpu.CompilerParams(
            dimension_semantics=("parallel",),
            vmem_limit_bytes=32 * 1024 * 1024),
    )(to_slab(pred), to_slab(tgt))

    # Tiny wrapper-side reduction of per-block partials + loss weights.
    coord_loss = jnp.sum(partials[:, 0, 0]) * COORD_W
    obj_loss = jnp.sum(partials[:, 1, 0])
    noobj_loss = jnp.sum(partials[:, 2, 0]) * NOOBJ_W
    class_loss = jnp.sum(partials[:, 3, 0])
    total_loss = coord_loss + obj_loss + noobj_loss + class_loss
    return total_loss, coord_loss, obj_loss, noobj_loss, class_loss


def _yolo_loss_ref(predictions, target):
    """Pure-JAX reference mirroring the PyTorch module, for verification."""
    pred = jnp.asarray(predictions, jnp.float32).reshape(-1, 7, 7, 30)
    tgt = jnp.asarray(target, jnp.float32).reshape(pred.shape)
    m = pred.shape[0] * 49
    p = pred.reshape(m, 30)
    t = tgt.reshape(m, 30)

    def iou(a, b):
        a_x1 = a[:, 0] - a[:, 2] * 0.5
        a_y1 = a[:, 1] - a[:, 3] * 0.5
        a_x2 = a[:, 0] + a[:, 2] * 0.5
        a_y2 = a[:, 1] + a[:, 3] * 0.5
        b_x1 = b[:, 0] - b[:, 2] * 0.5
        b_y1 = b[:, 1] - b[:, 3] * 0.5
        b_x2 = b[:, 0] + b[:, 2] * 0.5
        b_y2 = b[:, 1] + b[:, 3] * 0.5
        iw = jnp.maximum(jnp.minimum(a_x2, b_x2) - jnp.maximum(a_x1, b_x1), 0.0)
        ih = jnp.maximum(jnp.minimum(a_y2, b_y2) - jnp.maximum(a_y1, b_y1), 0.0)
        inter = iw * ih
        area_a = jnp.abs((a_x2 - a_x1) * (a_y2 - a_y1))
        area_b = jnp.abs((b_x2 - b_x1) * (b_y2 - b_y1))
        return inter / (area_a + area_b - inter + 1e-6)

    iou1 = iou(p[:, 21:25], t[:, 21:25])
    iou2 = iou(p[:, 26:30], t[:, 21:25])
    resp = (iou2 > iou1).astype(jnp.float32)[:, None]
    mask = t[:, 20:21]

    bp = mask * (resp * p[:, 26:30] + (1.0 - resp) * p[:, 21:25])
    bt = mask * t[:, 21:25]
    coord = (jnp.sum((bp[:, 0:2] - bt[:, 0:2]) ** 2)
             + jnp.sum((jnp.sqrt(jnp.clip(bp[:, 2:4] + 1e-6, 0.0, 1.0))
                        - jnp.sqrt(bt[:, 2:4])) ** 2)) * COORD_W
    conf = resp * p[:, 25:26] + (1.0 - resp) * p[:, 20:21]
    obj = jnp.sum((mask * conf - mask * t[:, 20:21]) ** 2)
    noobj = (jnp.sum(((1 - mask) * p[:, 20:21] - (1 - mask) * t[:, 20:21]) ** 2)
             + jnp.sum(((1 - mask) * p[:, 25:26] - (1 - mask) * t[:, 20:21]) ** 2)
             ) * NOOBJ_W
    cls = jnp.sum((mask * p[:, 0:20] - mask * t[:, 0:20]) ** 2)
    total = coord + obj + noobj + cls
    return total, coord, obj, noobj, cls


if __name__ == "__main__":
    B = 2
    key = jax.random.PRNGKey(0)
    k1, k2, k3 = jax.random.split(key, 3)

    # Predictions: raw network output (B, 7*7*30)
    predictions = jax.random.normal(k1, (B, 7 * 7 * 30), dtype=jnp.float32)

    # Target: class scores / coords in [0,1], objectness in {0,1}
    target = jax.random.uniform(k2, (B, 7, 7, 30), dtype=jnp.float32)
    obj_mask = (jax.random.uniform(k3, (B, 7, 7)) > 0.5).astype(jnp.float32)
    target = target.at[..., 20].set(obj_mask)

    losses = jax.block_until_ready(yolo_loss(predictions, target))
    ref = jax.block_until_ready(_yolo_loss_ref(predictions, target))

    for got, want in zip(losses, ref):
        assert jnp.allclose(got, want, rtol=1e-4, atol=1e-4), (got, want)

    print("KERNEL_OK")
</pallas_src>

<mosaic_0001>
module attributes {stable_mosaic.version = 11 : i64} {
  func.func @kernel(%arg0: i32, %arg1: memref<30x8x128xf32, #tpu.memory_space<vmem>>, %arg2: memref<30x8x128xf32, #tpu.memory_space<vmem>>, %arg3: memref<1x8x128xf32, #tpu.memory_space<vmem>>) attributes {dimension_semantics = [#tpu.dimension_semantics<parallel>], iteration_bounds = array<i64: 1>, scalar_prefetch = 0 : i64, scratch_operands = 0 : i64, tpu.core_type = #tpu.core_type<tc>, window_params = [{transform_indices = @transform_0, window_bounds = array<i64: 30, 8, 128>}, {transform_indices = @transform_1, window_bounds = array<i64: 30, 8, 128>}, {transform_indices = @transform_2, window_bounds = array<i64: 1, 8, 128>}]} {
    %c21 = arith.constant 21 : index
    %c0 = arith.constant 0 : index
    %c0_0 = arith.constant 0 : index
    %0 = vector.load %arg1[%c21, %c0, %c0_0] : memref<30x8x128xf32, #tpu.memory_space<vmem>>, vector<4x8x128xf32>
    %c26 = arith.constant 26 : index
    %c0_1 = arith.constant 0 : index
    %c0_2 = arith.constant 0 : index
    %1 = vector.load %arg1[%c26, %c0_1, %c0_2] : memref<30x8x128xf32, #tpu.memory_space<vmem>>, vector<4x8x128xf32>
    %c20 = arith.constant 20 : index
    %c0_3 = arith.constant 0 : index
    %c0_4 = arith.constant 0 : index
    %2 = vector.load %arg1[%c20, %c0_3, %c0_4] : memref<30x8x128xf32, #tpu.memory_space<vmem>>, vector<1x8x128xf32>
    %3 = vector.shape_cast %2 : vector<1x8x128xf32> to vector<8x128xf32>
    %c25 = arith.constant 25 : index
    %c0_5 = arith.constant 0 : index
    %c0_6 = arith.constant 0 : index
    %4 = vector.load %arg1[%c25, %c0_5, %c0_6] : memref<30x8x128xf32, #tpu.memory_space<vmem>>, vector<1x8x128xf32>
    %5 = vector.shape_cast %4 : vector<1x8x128xf32> to vector<8x128xf32>
    %c0_7 = arith.constant 0 : index
    %c0_8 = arith.constant 0 : index
    %c0_9 = arith.constant 0 : index
    %6 = vector.load %arg1[%c0_7, %c0_8, %c0_9] : memref<30x8x128xf32, #tpu.memory_space<vmem>>, vector<20x8x128xf32>
    %c21_10 = arith.constant 21 : index
    %c0_11 = arith.constant 0 : index
    %c0_12 = arith.constant 0 : index
    %7 = vector.load %arg2[%c21_10, %c0_11, %c0_12] : memref<30x8x128xf32, #tpu.memory_space<vmem>>, vector<4x8x128xf32>
    %c20_13 = arith.constant 20 : index
    %c0_14 = arith.constant 0 : index
    %c0_15 = arith.constant 0 : index
    %8 = vector.load %arg2[%c20_13, %c0_14, %c0_15] : memref<30x8x128xf32, #tpu.memory_space<vmem>>, vector<1x8x128xf32>
    %9 = vector.shape_cast %8 : vector<1x8x128xf32> to vector<8x128xf32>
    %c0_16 = arith.constant 0 : index
    %c0_17 = arith.constant 0 : index
    %c0_18 = arith.constant 0 : index
    %10 = vector.load %arg2[%c0_16, %c0_17, %c0_18] : memref<30x8x128xf32, #tpu.memory_space<vmem>>, vector<20x8x128xf32>
    %11 = vector.extract_strided_slice %0 {offsets = [0, 0, 0], sizes = [1, 8, 128], strides = [1, 1, 1]} : vector<4x8x128xf32> to vector<1x8x128xf32>
    %12 = vector.shape_cast %11 : vector<1x8x128xf32> to vector<8x128xf32>
    %13 = vector.extract_strided_slice %0 {offsets = [1, 0, 0], sizes = [1, 8, 128], strides = [1, 1, 1]} : vector<4x8x128xf32> to vector<1x8x128xf32>
    %14 = vector.shape_cast %13 : vector<1x8x128xf32> to vector<8x128xf32>
    %15 = vector.extract_strided_slice %0 {offsets = [2, 0, 0], sizes = [1, 8, 128], strides = [1, 1, 1]} : vector<4x8x128xf32> to vector<1x8x128xf32>
    %16 = vector.shape_cast %15 : vector<1x8x128xf32> to vector<8x128xf32>
    %17 = vector.extract_strided_slice %0 {offsets = [3, 0, 0], sizes = [1, 8, 128], strides = [1, 1, 1]} : vector<4x8x128xf32> to vector<1x8x128xf32>
    %18 = vector.shape_cast %17 : vector<1x8x128xf32> to vector<8x128xf32>
    %19 = vector.extract_strided_slice %7 {offsets = [0, 0, 0], sizes = [1, 8, 128], strides = [1, 1, 1]} : vector<4x8x128xf32> to vector<1x8x128xf32>
    %20 = vector.shape_cast %19 : vector<1x8x128xf32> to vector<8x128xf32>
    %21 = vector.extract_strided_slice %7 {offsets = [1, 0, 0], sizes = [1, 8, 128], strides = [1, 1, 1]} : vector<4x8x128xf32> to vector<1x8x128xf32>
    %22 = vector.shape_cast %21 : vector<1x8x128xf32> to vector<8x128xf32>
    %23 = vector.extract_strided_slice %7 {offsets = [2, 0, 0], sizes = [1, 8, 128], strides = [1, 1, 1]} : vector<4x8x128xf32> to vector<1x8x128xf32>
    %24 = vector.shape_cast %23 : vector<1x8x128xf32> to vector<8x128xf32>
    %25 = vector.extract_strided_slice %7 {offsets = [3, 0, 0], sizes = [1, 8, 128], strides = [1, 1, 1]} : vector<4x8x128xf32> to vector<1x8x128xf32>
    %26 = vector.shape_cast %25 : vector<1x8x128xf32> to vector<8x128xf32>
    %cst = arith.constant 5.000000e-01 : f32
    %27 = vector.broadcast %cst : f32 to vector<8x128xf32>
    %28 = arith.mulf %16, %27 : vector<8x128xf32>
    %29 = arith.subf %12, %28 : vector<8x128xf32>
    %cst_19 = arith.constant 5.000000e-01 : f32
    %30 = vector.broadcast %cst_19 : f32 to vector<8x128xf32>
    %31 = arith.mulf %18, %30 : vector<8x128xf32>
    %32 = arith.subf %14, %31 : vector<8x128xf32>
    %cst_20 = arith.constant 5.000000e-01 : f32
    %33 = vector.broadcast %cst_20 : f32 to vector<8x128xf32>
    %34 = arith.mulf %16, %33 : vector<8x128xf32>
    %35 = arith.addf %12, %34 : vector<8x128xf32>
    %cst_21 = arith.constant 5.000000e-01 : f32
    %36 = vector.broadcast %cst_21 : f32 to vector<8x128xf32>
    %37 = arith.mulf %18, %36 : vector<8x128xf32>
    %38 = arith.addf %14, %37 : vector<8x128xf32>
    %cst_22 = arith.constant 5.000000e-01 : f32
    %39 = vector.broadcast %cst_22 : f32 to vector<8x128xf32>
    %40 = arith.mulf %24, %39 : vector<8x128xf32>
    %41 = arith.subf %20, %40 : vector<8x128xf32>
    %cst_23 = arith.constant 5.000000e-01 : f32
    %42 = vector.broadcast %cst_23 : f32 to vector<8x128xf32>
    %43 = arith.mulf %26, %42 : vector<8x128xf32>
    %44 = arith.subf %22, %43 : vector<8x128xf32>
    %cst_24 = arith.constant 5.000000e-01 : f32
    %45 = vector.broadcast %cst_24 : f32 to vector<8x128xf32>
    %46 = arith.mulf %24, %45 : vector<8x128xf32>
    %47 = arith.addf %20, %46 : vector<8x128xf32>
    %cst_25 = arith.constant 5.000000e-01 : f32
    %48 = vector.broadcast %cst_25 : f32 to vector<8x128xf32>
    %49 = arith.mulf %26, %48 : vector<8x128xf32>
    %50 = arith.addf %22, %49 : vector<8x128xf32>
    %51 = arith.minimumf %35, %47 : vector<8x128xf32>
    %52 = arith.maximumf %29, %41 : vector<8x128xf32>
    %53 = arith.subf %51, %52 : vector<8x128xf32>
    %cst_26 = arith.constant 0.000000e+00 : f32
    %54 = vector.broadcast %cst_26 : f32 to vector<8x128xf32>
    %55 = arith.maximumf %53, %54 : vector<8x128xf32>
    %56 = arith.minimumf %38, %50 : vector<8x128xf32>
    %57 = arith.maximumf %32, %44 : vector<8x128xf32>
    %58 = arith.subf %56, %57 : vector<8x128xf32>
    %cst_27 = arith.constant 0.000000e+00 : f32
    %59 = vector.broadcast %cst_27 : f32 to vector<8x128xf32>
    %60 = arith.maximumf %58, %59 : vector<8x128xf32>
    %61 = arith.mulf %55, %60 : vector<8x128xf32>
    %62 = arith.subf %35, %29 : vector<8x128xf32>
    %63 = arith.subf %38, %32 : vector<8x128xf32>
    %64 = arith.mulf %62, %63 : vector<8x128xf32>
    %65 = math.absf %64 : vector<8x128xf32>
    %66 = arith.subf %47, %41 : vector<8x128xf32>
    %67 = arith.subf %50, %44 : vector<8x128xf32>
    %68 = arith.mulf %66, %67 : vector<8x128xf32>
    %69 = math.absf %68 : vector<8x128xf32>
    %70 = arith.addf %65, %69 : vector<8x128xf32>
    %71 = arith.subf %70, %61 : vector<8x128xf32>
    %cst_28 = arith.constant 9.99999997E-7 : f32
    %72 = vector.broadcast %cst_28 : f32 to vector<8x128xf32>
    %73 = arith.addf %71, %72 : vector<8x128xf32>
    %74 = arith.divf %61, %73 : vector<8x128xf32>
    %75 = vector.extract_strided_slice %1 {offsets = [0, 0, 0], sizes = [1, 8, 128], strides = [1, 1, 1]} : vector<4x8x128xf32> to vector<1x8x128xf32>
    %76 = vector.shape_cast %75 : vector<1x8x128xf32> to vector<8x128xf32>
    %77 = vector.extract_strided_slice %1 {offsets = [1, 0, 0], sizes = [1, 8, 128], strides = [1, 1, 1]} : vector<4x8x128xf32> to vector<1x8x128xf32>
    %78 = vector.shape_cast %77 : vector<1x8x128xf32> to vector<8x128xf32>
    %79 = vector.extract_strided_slice %1 {offsets = [2, 0, 0], sizes = [1, 8, 128], strides = [1, 1, 1]} : vector<4x8x128xf32> to vector<1x8x128xf32>
    %80 = vector.shape_cast %79 : vector<1x8x128xf32> to vector<8x128xf32>
    %81 = vector.extract_strided_slice %1 {offsets = [3, 0, 0], sizes = [1, 8, 128], strides = [1, 1, 1]} : vector<4x8x128xf32> to vector<1x8x128xf32>
    %82 = vector.shape_cast %81 : vector<1x8x128xf32> to vector<8x128xf32>
    %83 = vector.extract_strided_slice %7 {offsets = [0, 0, 0], sizes = [1, 8, 128], strides = [1, 1, 1]} : vector<4x8x128xf32> to vector<1x8x128xf32>
    %84 = vector.shape_cast %83 : vector<1x8x128xf32> to vector<8x128xf32>
    %85 = vector.extract_strided_slice %7 {offsets = [1, 0, 0], sizes = [1, 8, 128], strides = [1, 1, 1]} : vector<4x8x128xf32> to vector<1x8x128xf32>
    %86 = vector.shape_cast %85 : vector<1x8x128xf32> to vector<8x128xf32>
    %87 = vector.extract_strided_slice %7 {offsets = [2, 0, 0], sizes = [1, 8, 128], strides = [1, 1, 1]} : vector<4x8x128xf32> to vector<1x8x128xf32>
    %88 = vector.shape_cast %87 : vector<1x8x128xf32> to vector<8x128xf32>
    %89 = vector.extract_strided_slice %7 {offsets = [3, 0, 0], sizes = [1, 8, 128], strides = [1, 1, 1]} : vector<4x8x128xf32> to vector<1x8x128xf32>
    %90 = vector.shape_cast %89 : vector<1x8x128xf32> to vector<8x128xf32>
    %cst_29 = arith.constant 5.000000e-01 : f32
    %91 = vector.broadcast %cst_29 : f32 to vector<8x128xf32>
    %92 = arith.mulf %80, %91 : vector<8x128xf32>
    %93 = arith.subf %76, %92 : vector<8x128xf32>
    %cst_30 = arith.constant 5.000000e-01 : f32
    %94 = vector.broadcast %cst_30 : f32 to vector<8x128xf32>
    %95 = arith.mulf %82, %94 : vector<8x128xf32>
    %96 = arith.subf %78, %95 : vector<8x128xf32>
    %cst_31 = arith.constant 5.000000e-01 : f32
    %97 = vector.broadcast %cst_31 : f32 to vector<8x128xf32>
    %98 = arith.mulf %80, %97 : vector<8x128xf32>
    %99 = arith.addf %76, %98 : vector<8x128xf32>
    %cst_32 = arith.constant 5.000000e-01 : f32
    %100 = vector.broadcast %cst_32 : f32 to vector<8x128xf32>
    %101 = arith.mulf %82, %100 : vector<8x128xf32>
    %102 = arith.addf %78, %101 : vector<8x128xf32>
    %cst_33 = arith.constant 5.000000e-01 : f32
    %103 = vector.broadcast %cst_33 : f32 to vector<8x128xf32>
    %104 = arith.mulf %88, %103 : vector<8x128xf32>
    %105 = arith.subf %84, %104 : vector<8x128xf32>
    %cst_34 = arith.constant 5.000000e-01 : f32
    %106 = vector.broadcast %cst_34 : f32 to vector<8x128xf32>
    %107 = arith.mulf %90, %106 : vector<8x128xf32>
    %108 = arith.subf %86, %107 : vector<8x128xf32>
    %cst_35 = arith.constant 5.000000e-01 : f32
    %109 = vector.broadcast %cst_35 : f32 to vector<8x128xf32>
    %110 = arith.mulf %88, %109 : vector<8x128xf32>
    %111 = arith.addf %84, %110 : vector<8x128xf32>
    %cst_36 = arith.constant 5.000000e-01 : f32
    %112 = vector.broadcast %cst_36 : f32 to vector<8x128xf32>
    %113 = arith.mulf %90, %112 : vector<8x128xf32>
    %114 = arith.addf %86, %113 : vector<8x128xf32>
    %115 = arith.minimumf %99, %111 : vector<8x128xf32>
    %116 = arith.maximumf %93, %105 : vector<8x128xf32>
    %117 = arith.subf %115, %116 : vector<8x128xf32>
    %cst_37 = arith.constant 0.000000e+00 : f32
    %118 = vector.broadcast %cst_37 : f32 to vector<8x128xf32>
    %119 = arith.maximumf %117, %118 : vector<8x128xf32>
    %120 = arith.minimumf %102, %114 : vector<8x128xf32>
    %121 = arith.maximumf %96, %108 : vector<8x128xf32>
    %122 = arith.subf %120, %121 : vector<8x128xf32>
    %cst_38 = arith.constant 0.000000e+00 : f32
    %123 = vector.broadcast %cst_38 : f32 to vector<8x128xf32>
    %124 = arith.maximumf %122, %123 : vector<8x128xf32>
    %125 = arith.mulf %119, %124 : vector<8x128xf32>
    %126 = arith.subf %99, %93 : vector<8x128xf32>
    %127 = arith.subf %102, %96 : vector<8x128xf32>
    %128 = arith.mulf %126, %127 : vector<8x128xf32>
    %129 = math.absf %128 : vector<8x128xf32>
    %130 = arith.subf %111, %105 : vector<8x128xf32>
    %131 = arith.subf %114, %108 : vector<8x128xf32>
    %132 = arith.mulf %130, %131 : vector<8x128xf32>
    %133 = math.absf %132 : vector<8x128xf32>
    %134 = arith.addf %129, %133 : vector<8x128xf32>
    %135 = arith.subf %134, %125 : vector<8x128xf32>
    %cst_39 = arith.constant 9.99999997E-7 : f32
    %136 = vector.broadcast %cst_39 : f32 to vector<8x128xf32>
    %137 = arith.addf %135, %136 : vector<8x128xf32>
    %138 = arith.divf %125, %137 : vector<8x128xf32>
    %139 = arith.cmpf ogt, %138, %74 : vector<8x128xf32>
    %140 = arith.extui %139 : vector<8x128xi1> to vector<8x128xi32>
    %141 = arith.sitofp %140 : vector<8x128xi32> to vector<8x128xf32>
    %142 = vector.shape_cast %141 : vector<8x128xf32> to vector<1x8x128xf32>
    %143 = vector.shape_cast %9 : vector<8x128xf32> to vector<1x8x128xf32>
    %144 = vector.broadcast %142 : vector<1x8x128xf32> to vector<4x8x128xf32>
    %145 = arith.mulf %144, %1 : vector<4x8x128xf32>
    %cst_40 = arith.constant 1.000000e+00 : f32
    %146 = vector.broadcast %cst_40 : f32 to vector<1x8x128xf32>
    %147 = arith.subf %146, %142 : vector<1x8x128xf32>
    %148 = vector.broadcast %147 : vector<1x8x128xf32> to vector<4x8x128xf32>
    %149 = arith.mulf %148, %0 : vector<4x8x128xf32>
    %150 = arith.addf %145, %149 : vector<4x8x128xf32>
    %151 = vector.broadcast %143 : vector<1x8x128xf32> to vector<4x8x128xf32>
    %152 = arith.mulf %151, %150 : vector<4x8x128xf32>
    %153 = vector.broadcast %143 : vector<1x8x128xf32> to vector<4x8x128xf32>
    %154 = arith.mulf %153, %7 : vector<4x8x128xf32>
    %c1024_i32 = arith.constant 1024 : i32
    %155 = arith.muli %arg0, %c1024_i32 : i32
    %156 = tpu.iota {dimensions = array<i32: 0>} : vector<8x128xi32>
    %157 = tpu.iota {dimensions = array<i32: 1>} : vector<8x128xi32>
    %c128_i32 = arith.constant 128 : i32
    %158 = vector.broadcast %c128_i32 : i32 to vector<8x128xi32>
    %159 = arith.muli %156, %158 : vector<8x128xi32>
    %160 = vector.broadcast %155 : i32 to vector<8x128xi32>
    %161 = arith.addi %160, %159 : vector<8x128xi32>
    %162 = arith.addi %161, %157 : vector<8x128xi32>
    %c98_i32 = arith.constant 98 : i32
    %163 = vector.broadcast %c98_i32 : i32 to vector<8x128xi32>
    %164 = arith.cmpi slt, %162, %163 : vector<8x128xi32>
    %165 = arith.extui %164 : vector<8x128xi1> to vector<8x128xi32>
    %166 = arith.sitofp %165 : vector<8x128xi32> to vector<8x128xf32>
    %167 = vector.extract_strided_slice %152 {offsets = [0, 0, 0], sizes = [1, 8, 128], strides = [1, 1, 1]} : vector<4x8x128xf32> to vector<1x8x128xf32>
    %168 = vector.shape_cast %167 : vector<1x8x128xf32> to vector<8x128xf32>
    %169 = vector.extract_strided_slice %154 {offsets = [0, 0, 0], sizes = [1, 8, 128], strides = [1, 1, 1]} : vector<4x8x128xf32> to vector<1x8x128xf32>
    %170 = vector.shape_cast %169 : vector<1x8x128xf32> to vector<8x128xf32>
    %171 = arith.subf %168, %170 : vector<8x128xf32>
    %172 = arith.mulf %171, %171 : vector<8x128xf32>
    %173 = vector.extract_strided_slice %152 {offsets = [1, 0, 0], sizes = [1, 8, 128], strides = [1, 1, 1]} : vector<4x8x128xf32> to vector<1x8x128xf32>
    %174 = vector.shape_cast %173 : vector<1x8x128xf32> to vector<8x128xf32>
    %175 = vector.extract_strided_slice %154 {offsets = [1, 0, 0], sizes = [1, 8, 128], strides = [1, 1, 1]} : vector<4x8x128xf32> to vector<1x8x128xf32>
    %176 = vector.shape_cast %175 : vector<1x8x128xf32> to vector<8x128xf32>
    %177 = arith.subf %174, %176 : vector<8x128xf32>
    %178 = arith.mulf %177, %177 : vector<8x128xf32>
    %179 = arith.addf %172, %178 : vector<8x128xf32>
    %180 = vector.extract_strided_slice %152 {offsets = [2, 0, 0], sizes = [2, 8, 128], strides = [1, 1, 1]} : vector<4x8x128xf32> to vector<2x8x128xf32>
    %cst_41 = arith.constant 9.99999997E-7 : f32
    %181 = vector.broadcast %cst_41 : f32 to vector<2x8x128xf32>
    %182 = arith.addf %180, %181 : vector<2x8x128xf32>
    %cst_42 = arith.constant 0.000000e+00 : f32
    %cst_43 = arith.constant 1.000000e+00 : f32
    %183 = vector.broadcast %cst_42 : f32 to vector<2x8x128xf32>
    %184 = arith.maximumf %183, %182 : vector<2x8x128xf32>
    %185 = vector.broadcast %cst_43 : f32 to vector<2x8x128xf32>
    %186 = arith.minimumf %185, %184 : vector<2x8x128xf32>
    %187 = math.sqrt %186 : vector<2x8x128xf32>
    %188 = vector.extract_strided_slice %154 {offsets = [2, 0, 0], sizes = [2, 8, 128], strides = [1, 1, 1]} : vector<4x8x128xf32> to vector<2x8x128xf32>
    %189 = math.sqrt %188 : vector<2x8x128xf32>
    %190 = vector.extract_strided_slice %187 {offsets = [0, 0, 0], sizes = [1, 8, 128], strides = [1, 1, 1]} : vector<2x8x128xf32> to vector<1x8x128xf32>
    %191 = vector.shape_cast %190 : vector<1x8x128xf32> to vector<8x128xf32>
    %192 = vector.extract_strided_slice %189 {offsets = [0, 0, 0], sizes = [1, 8, 128], strides = [1, 1, 1]} : vector<2x8x128xf32> to vector<1x8x128xf32>
    %193 = vector.shape_cast %192 : vector<1x8x128xf32> to vector<8x128xf32>
    %194 = arith.subf %191, %193 : vector<8x128xf32>
    %195 = arith.mulf %194, %194 : vector<8x128xf32>
    %196 = vector.extract_strided_slice %187 {offsets = [1, 0, 0], sizes = [1, 8, 128], strides = [1, 1, 1]} : vector<2x8x128xf32> to vector<1x8x128xf32>
    %197 = vector.shape_cast %196 : vector<1x8x128xf32> to vector<8x128xf32>
    %198 = vector.extract_strided_slice %189 {offsets = [1, 0, 0], sizes = [1, 8, 128], strides = [1, 1, 1]} : vector<2x8x128xf32> to vector<1x8x128xf32>
    %199 = vector.shape_cast %198 : vector<1x8x128xf32> to vector<8x128xf32>
    %200 = arith.subf %197, %199 : vector<8x128xf32>
    %201 = arith.mulf %200, %200 : vector<8x128xf32>
    %202 = arith.addf %195, %201 : vector<8x128xf32>
    %203 = arith.addf %179, %202 : vector<8x128xf32>
    %204 = arith.mulf %166, %203 : vector<8x128xf32>
    %205 = vector.shape_cast %204 : vector<8x128xf32> to vector<1x8x128xf32>
    %cst_44 = arith.constant dense<0.000000e+00> : vector<1xf32>
    %206 = vector.multi_reduction <add>, %205, %cst_44 [1, 2] : vector<1x8x128xf32> to vector<1xf32>
    %207 = vector.shape_cast %206 : vector<1xf32> to vector<1x1x1xf32>
    %208 = vector.extract %207[0, 0, 0] : f32 from vector<1x1x1xf32>
    %209 = arith.mulf %141, %5 : vector<8x128xf32>
    %cst_45 = arith.constant 1.000000e+00 : f32
    %210 = vector.broadcast %cst_45 : f32 to vector<8x128xf32>
    %211 = arith.subf %210, %141 : vector<8x128xf32>
    %212 = arith.mulf %211, %3 : vector<8x128xf32>
    %213 = arith.addf %209, %212 : vector<8x128xf32>
    %214 = arith.mulf %9, %213 : vector<8x128xf32>
    %215 = arith.mulf %9, %9 : vector<8x128xf32>
    %216 = arith.subf %214, %215 : vector<8x128xf32>
    %217 = arith.mulf %216, %216 : vector<8x128xf32>
    %218 = vector.shape_cast %217 : vector<8x128xf32> to vector<1x8x128xf32>
    %cst_46 = arith.constant dense<0.000000e+00> : vector<1xf32>
    %219 = vector.multi_reduction <add>, %218, %cst_46 [1, 2] : vector<1x8x128xf32> to vector<1xf32>
    %220 = vector.shape_cast %219 : vector<1xf32> to vector<1x1x1xf32>
    %221 = vector.extract %220[0, 0, 0] : f32 from vector<1x1x1xf32>
    %cst_47 = arith.constant 1.000000e+00 : f32
    %222 = vector.broadcast %cst_47 : f32 to vector<8x128xf32>
    %223 = arith.subf %222, %9 : vector<8x128xf32>
    %224 = arith.mulf %223, %3 : vector<8x128xf32>
    %225 = arith.mulf %223, %9 : vector<8x128xf32>
    %226 = arith.subf %224, %225 : vector<8x128xf32>
    %227 = arith.mulf %226, %226 : vector<8x128xf32>
    %228 = vector.shape_cast %227 : vector<8x128xf32> to vector<1x8x128xf32>
    %cst_48 = arith.constant dense<0.000000e+00> : vector<1xf32>
    %229 = vector.multi_reduction <add>, %228, %cst_48 [1, 2] : vector<1x8x128xf32> to vector<1xf32>
    %230 = vector.shape_cast %229 : vector<1xf32> to vector<1x1x1xf32>
    %231 = vector.extract %230[0, 0, 0] : f32 from vector<1x1x1xf32>
    %232 = arith.mulf %223, %5 : vector<8x128xf32>
    %233 = arith.mulf %223, %9 : vector<8x128xf32>
    %234 = arith.subf %232, %233 : vector<8x128xf32>
    %235 = arith.mulf %234, %234 : vector<8x128xf32>
    %236 = vector.shape_cast %235 : vector<8x128xf32> to vector<1x8x128xf32>
    %cst_49 = arith.constant dense<0.000000e+00> : vector<1xf32>
    %237 = vector.multi_reduction <add>, %236, %cst_49 [1, 2] : vector<1x8x128xf32> to vector<1xf32>
    %238 = vector.shape_cast %237 : vector<1xf32> to vector<1x1x1xf32>
    %239 = vector.extract %238[0, 0, 0] : f32 from vector<1x1x1xf32>
    %240 = arith.addf %231, %239 : f32
    %241 = vector.broadcast %143 : vector<1x8x128xf32> to vector<20x8x128xf32>
    %242 = arith.mulf %241, %6 : vector<20x8x128xf32>
    %243 = vector.broadcast %143 : vector<1x8x128xf32> to vector<20x8x128xf32>
    %244 = arith.mulf %243, %10 : vector<20x8x128xf32>
    %245 = arith.subf %242, %244 : vector<20x8x128xf32>
    %246 = arith.mulf %245, %245 : vector<20x8x128xf32>
    %cst_50 = arith.constant dense<0.000000e+00> : vector<8x128xf32>
    %247 = vector.multi_reduction <add>, %246, %cst_50 [0] : vector<20x8x128xf32> to vector<8x128xf32>
    %248 = vector.shape_cast %247 : vector<8x128xf32> to vector<1x8x128xf32>
    %cst_51 = arith.constant dense<0.000000e+00> : vector<1xf32>
    %249 = vector.multi_reduction <add>, %248, %cst_51 [1, 2] : vector<1x8x128xf32> to vector<1xf32>
    %250 = vector.shape_cast %249 : vector<1xf32> to vector<1x1x1xf32>
    %251 = vector.extract %250[0, 0, 0] : f32 from vector<1x1x1xf32>
    %252 = tpu.iota {dimensions = array<i32: 0>} : vector<8x128xi32>
    %c0_i32 = arith.constant 0 : i32
    %253 = vector.broadcast %c0_i32 : i32 to vector<8x128xi32>
    %254 = arith.cmpi eq, %252, %253 : vector<8x128xi32>
    %cst_52 = arith.constant 0.000000e+00 : f32
    %255 = vector.broadcast %208 : f32 to vector<8x128xf32>
    %256 = vector.broadcast %cst_52 : f32 to vector<8x128xf32>
    %257 = arith.select %254, %255, %256 : vector<8x128xi1>, vector<8x128xf32>
    %c1_i32 = arith.constant 1 : i32
    %258 = vector.broadcast %c1_i32 : i32 to vector<8x128xi32>
    %259 = arith.cmpi eq, %252, %258 : vector<8x128xi32>
    %cst_53 = arith.constant 0.000000e+00 : f32
    %260 = vector.broadcast %221 : f32 to vector<8x128xf32>
    %261 = vector.broadcast %cst_53 : f32 to vector<8x128xf32>
    %262 = arith.select %259, %260, %261 : vector<8x128xi1>, vector<8x128xf32>
    %263 = arith.addf %257, %262 : vector<8x128xf32>
    %c2_i32 = arith.constant 2 : i32
    %264 = vector.broadcast %c2_i32 : i32 to vector<8x128xi32>
    %265 = arith.cmpi eq, %252, %264 : vector<8x128xi32>
    %cst_54 = arith.constant 0.000000e+00 : f32
    %266 = vector.broadcast %240 : f32 to vector<8x128xf32>
    %267 = vector.broadcast %cst_54 : f32 to vector<8x128xf32>
    %268 = arith.select %265, %266, %267 : vector<8x128xi1>, vector<8x128xf32>
    %269 = arith.addf %263, %268 : vector<8x128xf32>
    %c3_i32 = arith.constant 3 : i32
    %270 = vector.broadcast %c3_i32 : i32 to vector<8x128xi32>
    %271 = arith.cmpi eq, %252, %270 : vector<8x128xi32>
    %cst_55 = arith.constant 0.000000e+00 : f32
    %272 = vector.broadcast %251 : f32 to vector<8x128xf32>
    %273 = vector.broadcast %cst_55 : f32 to vector<8x128xf32>
    %274 = arith.select %271, %272, %273 : vector<8x128xi1>, vector<8x128xf32>
    %275 = arith.addf %269, %274 : vector<8x128xf32>
    %276 = vector.shape_cast %275 : vector<8x128xf32> to vector<1x8x128xf32>
    %c0_56 = arith.constant 0 : index
    %c0_57 = arith.constant 0 : index
    %c0_58 = arith.constant 0 : index
    %277 = vector.load %arg3[%c0_56, %c0_57, %c0_58] : memref<1x8x128xf32, #tpu.memory_space<vmem>>, vector<1x8x128xf32>
    tpu.vector_store %arg3[%c0_56, %c0_57, %c0_58], %276 {strides = array<i32>} : memref<1x8x128xf32, #tpu.memory_space<vmem>>, vector<1x8x128xf32>,
    return
  }
  func.func @transform_0(%arg0: i32) -> (i32, i32, i32) {
    %c0_i32 = arith.constant 0 : i32
    %c0_i32_0 = arith.constant 0 : i32
    %c0_i32_1 = arith.constant 0 : i32
    return %c0_i32, %arg0, %c0_i32_0 : i32, i32, i32
  }
  func.func @transform_1(%arg0: i32) -> (i32, i32, i32) {
    %c0_i32 = arith.constant 0 : i32
    %c0_i32_0 = arith.constant 0 : i32
    %c0_i32_1 = arith.constant 0 : i32
    return %c0_i32, %arg0, %c0_i32_0 : i32, i32, i32
  }
  func.func @transform_2(%arg0: i32) -> (i32, i32, i32) {
    %c0_i32 = arith.constant 0 : i32
    %c0_i32_0 = arith.constant 0 : i32
    %c0_i32_1 = arith.constant 0 : i32
    return %arg0, %c0_i32, %c0_i32_0 : i32, i32, i32
  }
}

</mosaic_0001>

<llo_original>
// kernel: tpu_custom_call.1
$region0: #{tpu_custom_call.1}
  #allocation0 [shape = 'u32[]', space=smem, size = 0x4, offset = 0x4, fixed_abs, tag = 'smem constant byte address 0x4 - core index']
  #allocation1 [shape = 'u32[144,128]{1,0:T(1,128)}', space=vmem, size = 0x12000, scoped, tag = 'internal scratch']
  %s0 = inlined_call_operand.hbm [shape: f32[30,8,128], index: 0, kind: input, shape index: {}]
  %s1 = inlined_call_operand.hbm [shape: f32[30,8,128], index: 1, kind: input, shape index: {}]
  %s2 = inlined_call_operand.hbm [shape: f32[1,8,128], index: 2, kind: output, shape index: {}]
  %s3 = sld [smem:[#allocation0]]
  $region26: #{tpu_custom_call.1} parent=0
    _
  %s5 = ssub.s32 1, %s3
  %s6 = scalar_select 0, %s5, %s3
  $region1: #{tpu_custom_call.1} parent=0
    #allocation2 [shape = 'u8[122880]{0}', space=vmem, size = 0x1e000, scoped, tag = 'input window, operand 0, single buffered']
    #allocation3 [shape = 's32[1]{0}', space=sflag, size = 0x4, scoped, tag = 'scoped memory for tpu_custom_call.1']
    #allocation4 [shape = 's32[1]{0}', space=sflag, size = 0x4, scoped, tag = 'scoped memory for tpu_custom_call.1']
    #allocation5 [shape = 'u8[122880]{0}', space=vmem, size = 0x1e000, scoped, tag = 'input window, operand 1, single buffered']
    #allocation6 [shape = 's32[1]{0}', space=sflag, size = 0x4, scoped, tag = 'scoped memory for tpu_custom_call.1']
    #allocation7 [shape = 'u8[4096]{0}', space=vmem, size = 0x1000, scoped, tag = 'output window, operand 0, single buffered']
    %7 = vsyncpa [#allocation3], 0
    %8 = vsyncpa [#allocation6], 0
    %9 = vsyncpa [#allocation4], 0
    // Predicated region
    $region2: #{tpu_custom_call.1} parent=1 // pred_check
      _
    $region3: #{tpu_custom_call.1} parent=1 // pred_check_branch
      %11 = sbr.rel (0) target = $region5
    $region4: #{tpu_custom_call.1} parent=1 // pred_region
      %s13 = ssub.s32 3840, 3840
      %14 = vsyncadd [#allocation3], %s13
      %s15 = sshll.u32 [#allocation2], 4
      %s16 = int_to_ptr.vmem [resolvable:$true] %s15
      %21 = dma.hbm_to_vmem [thread:$0]  %s0, 3840, %s16, [#allocation3], 128, 128, 8
    $region5: #{tpu_custom_call.1} parent=1 // pred_fallthru
      _
    // Predicated region
    $region6: #{tpu_custom_call.1} parent=1 // pred_check
      _
    $region7: #{tpu_custom_call.1} parent=1 // pred_check_branch
      %23 = sbr.rel (0) target = $region9
    $region8: #{tpu_custom_call.1} parent=1 // pred_region
      %s25 = ssub.s32 3840, 3840
      %26 = vsyncadd [#allocation6], %s25
      %s27 = sshll.u32 [#allocation5], 4
      %s28 = int_to_ptr.vmem [resolvable:$true] %s27
      %33 = dma.hbm_to_vmem [thread:$0]  %s1, 3840, %s28, [#allocation6], 128, 128, 8
    $region9: #{tpu_custom_call.1} parent=1 // pred_fallthru
      _
    // Predicated region
    $region10: #{tpu_custom_call.1} parent=1 // pred_check
      _
    $region11: #{tpu_custom_call.1} parent=1 // pred_check_branch
      %35 = sbr.rel (0) target = $region13
    $region12: #{tpu_custom_call.1} parent=1 // pred_region
      %36 = dma.done [#allocation3], 3840
    $region13: #{tpu_custom_call.1} parent=1 // pred_fallthru
      _
    // Predicated region
    $region14: #{tpu_custom_call.1} parent=1 // pred_check
      _
    $region15: #{tpu_custom_call.1} parent=1 // pred_check_branch
      %38 = sbr.rel (0) target = $region17
    $region16: #{tpu_custom_call.1} parent=1 // pred_region
      %39 = dma.done [#allocation6], 3840
    $region17: #{tpu_custom_call.1} parent=1 // pred_fallthru
      _
    %s40 = scalar_lea.vmem [#allocation2], 168
    %v41 = vld [vmem:[%s40] sm:$0xff]
    %v42 = vld [vmem:[%s40 + $0x8] sm:$0xff]
    %v43 = vld [vmem:[%s40 + $0x10] sm:$0xff]
    %v44 = vld [vmem:[%s40 + $0x18] sm:$0xff]
    %s45 = scalar_lea.vmem [#allocation2], 208
    %v46 = vld [vmem:[%s45] sm:$0xff]
    %v47 = vld [vmem:[%s45 + $0x8] sm:$0xff]
    %v48 = vld [vmem:[%s45 + $0x10] sm:$0xff]
    %v49 = vld [vmem:[%s45 + $0x18] sm:$0xff]
    %s50 = scalar_lea.vmem [#allocation2], 160
    %v51 = vld [vmem:[%s50] sm:$0xff]
    %s52 = scalar_lea.vmem [#allocation2], 200
    %v53 = vld [vmem:[%s52] sm:$0xff]
    %v54 = vld [vmem:[#allocation2] sm:$0xff]
    %v55 = vld [vmem:[#allocation2 + $0x8] sm:$0xff]
    %v56 = vld [vmem:[#allocation2 + $0x10] sm:$0xff]
    %v57 = vld [vmem:[#allocation2 + $0x18] sm:$0xff]
    %v58 = vld [vmem:[#allocation2 + $0x20] sm:$0xff]
    %v59 = vld [vmem:[#allocation2 + $0x28] sm:$0xff]
    %v60 = vld [vmem:[#allocation2 + $0x30] sm:$0xff]
    %v61 = vld [vmem:[#allocation2 + $0x38] sm:$0xff]
    %v62 = vld [vmem:[#allocation2 + $0x40] sm:$0xff]
    %v63 = vld [vmem:[#allocation2 + $0x48] sm:$0xff]
    %v64 = vld [vmem:[#allocation2 + $0x50] sm:$0xff]
    %v65 = vld [vmem:[#allocation2 + $0x58] sm:$0xff]
    %v66 = vld [vmem:[#allocation2 + $0x60] sm:$0xff]
    %v67 = vld [vmem:[#allocation2 + $0x68] sm:$0xff]
    %v68 = vld [vmem:[#allocation2 + $0x70] sm:$0xff]
    %v69 = vld [vmem:[#allocation2 + $0x78] sm:$0xff]
    %v70 = vld [vmem:[#allocation2 + $0x80] sm:$0xff]
    %v71 = vld [vmem:[#allocation2 + $0x88] sm:$0xff]
    %v72 = vld [vmem:[#allocation2 + $0x90] sm:$0xff]
    %v73 = vld [vmem:[#allocation2 + $0x98] sm:$0xff]
    %s74 = scalar_lea.vmem [#allocation5], 168
    %v75 = vld [vmem:[%s74] sm:$0xff]
    %v76 = vld [vmem:[%s74 + $0x8] sm:$0xff]
    %v77 = vld [vmem:[%s74 + $0x10] sm:$0xff]
    %v78 = vld [vmem:[%s74 + $0x18] sm:$0xff]
    %s79 = scalar_lea.vmem [#allocation5], 160
    %v80 = vld [vmem:[%s79] sm:$0xff]
    %v81 = vld [vmem:[#allocation5] sm:$0xff]
    %v82 = vld [vmem:[#allocation5 + $0x8] sm:$0xff]
    %v83 = vld [vmem:[#allocation5 + $0x10] sm:$0xff]
    %v84 = vld [vmem:[#allocation5 + $0x18] sm:$0xff]
    %v85 = vld [vmem:[#allocation5 + $0x20] sm:$0xff]
    %v86 = vld [vmem:[#allocation5 + $0x28] sm:$0xff]
    %v87 = vld [vmem:[#allocation5 + $0x30] sm:$0xff]
    %v88 = vld [vmem:[#allocation5 + $0x38] sm:$0xff]
    %v89 = vld [vmem:[#allocation5 + $0x40] sm:$0xff]
    %v90 = vld [vmem:[#allocation5 + $0x48] sm:$0xff]
    %v91 = vld [vmem:[#allocation5 + $0x50] sm:$0xff]
    %v92 = vld [vmem:[#allocation5 + $0x58] sm:$0xff]
    %v93 = vld [vmem:[#allocation5 + $0x60] sm:$0xff]
    %v94 = vld [vmem:[#allocation5 + $0x68] sm:$0xff]
    %v95 = vld [vmem:[#allocation5 + $0x70] sm:$0xff]
    %v96 = vld [vmem:[#allocation5 + $0x78] sm:$0xff]
    %v97 = vld [vmem:[#allocation5 + $0x80] sm:$0xff]
    %v98 = vld [vmem:[#allocation5 + $0x88] sm:$0xff]
    %v99 = vld [vmem:[#allocation5 + $0x90] sm:$0xff]
    %v100 = vld [vmem:[#allocation5 + $0x98] sm:$0xff]
    %v101 = vmul.f32 %v43, 0.5
    %v102 = vsub.f32 %v41, %v101
    %v103 = vmul.f32 %v44, 0.5
    %v104 = vsub.f32 %v42, %v103
    %v105 = vadd.f32 %v41, %v101
    %v106 = vadd.f32 %v42, %v103
    %v107 = vmul.f32 %v77, 0.5
    %v108 = vsub.f32 %v75, %v107
    %v109 = vmul.f32 %v78, 0.5
    %v110 = vsub.f32 %v76, %v109
    %v111 = vadd.f32 %v75, %v107
    %v112 = vadd.f32 %v76, %v109
    %v113 = vmin.f32 %v105, %v111
    %v114 = vmax.f32 %v102, %v108
    %v115 = vsub.f32 %v113, %v114
    %v116 = vmax.f32 %v115, 0.0
    %v117 = vmin.f32 %v106, %v112
    %v118 = vmax.f32 %v104, %v110
    %v119 = vsub.f32 %v117, %v118
    %v120 = vmax.f32 %v119, 0.0
    %v121 = vmul.f32 %v116, %v120
    %v122 = vsub.f32 %v105, %v102
    %v123 = vsub.f32 %v106, %v104
    %v124 = vmul.f32 %v122, %v123
    %v125 = vand.u32 2147483647, %v124
    %v126 = vsub.f32 %v111, %v108
    %v127 = vsub.f32 %v112, %v110
    %v128 = vmul.f32 %v126, %v127
    %v129 = vand.u32 2147483647, %v128
    %v130 = vadd.f32 %v125, %v129
    %v131 = vsub.f32 %v130, %v121
    %v132 = vadd.f32 %v131, 1e-06
    %v133 = vrcp.pop %v132
    %v134 = vmul.f32 %v121, %v133
    %v135 = vmul.f32 %v48, 0.5
    %v136 = vsub.f32 %v46, %v135
    %v137 = vmul.f32 %v49, 0.5
    %v138 = vsub.f32 %v47, %v137
    %v139 = vadd.f32 %v46, %v135
    %v140 = vadd.f32 %v47, %v137
    %v141 = vmin.f32 %v139, %v111
    %v142 = vmax.f32 %v136, %v108
    %v143 = vsub.f32 %v141, %v142
    %v144 = vmax.f32 %v143, 0.0
    %v145 = vmin.f32 %v140, %v112
    %v146 = vmax.f32 %v138, %v110
    %v147 = vsub.f32 %v145, %v146
    %v148 = vmax.f32 %v147, 0.0
    %v149 = vmul.f32 %v144, %v148
    %v150 = vsub.f32 %v139, %v136
    %v151 = vsub.f32 %v140, %v138
    %v152 = vmul.f32 %v150, %v151
    %v153 = vand.u32 2147483647, %v152
    %v154 = vadd.f32 %v153, %v129
    %v155 = vsub.f32 %v154, %v149
    %v156 = vadd.f32 %v155, 1e-06
    %v157 = vrcp.pop %v156
    %v158 = vmul.f32 %v149, %v157
    %vm159 = vcmp.gt.f32.partialorder %v158, %v134
    %v160 = vsel %vm159, 1, 0
    %v161 = vcvt.s32.f32 %v160
    %v162 = vmul.f32 %v161, %v46
    %v163 = vmul.f32 %v161, %v47
    %v164 = vmul.f32 %v161, %v48
    %v165 = vmul.f32 %v161, %v49
    %v166 = vsub.f32 1.0, %v161
    %v167 = vmul.f32 %v166, %v41
    %v168 = vmul.f32 %v166, %v42
    %v169 = vmul.f32 %v166, %v43
    %v170 = vmul.f32 %v166, %v44
    %v171 = vadd.f32 %v162, %v167
    %v172 = vadd.f32 %v163, %v168
    %v173 = vadd.f32 %v164, %v169
    %v174 = vadd.f32 %v165, %v170
    %v175 = vmul.f32 %v80, %v171
    %v176 = vmul.f32 %v80, %v172
    %v177 = vmul.f32 %v80, %v173
    %v178 = vmul.f32 %v80, %v174
    %v179 = vmul.f32 %v80, %v75
    %v180 = vmul.f32 %v80, %v76
    %v181 = vmul.f32 %v80, %v77
    %v182 = vmul.f32 %v80, %v78
    %s183 = smul.u32 0, 1024
    %v184 = vlaneseq
    %v185 = vshrl.u32 %v184, 7
    %v186 = vlaneseq
    %v187 = vand.u32 %v186, 127
    %v188 = vmul.u32 %v185, 128
    %v189 = vstv %s183
    %v190 = vadd.s32 %v189, %v188
    %v191 = vadd.s32 %v190, %v187
    %vm192 = vcmp.lt.s32.totalorder %v191, 98
    %v193 = vsel %vm192, 1, 0
    %v194 = vcvt.s32.f32 %v193
    %v195 = vsub.f32 %v175, %v179
    %v196 = vmul.f32 %v195, %v195
    %v197 = vsub.f32 %v176, %v180
    %v198 = vmul.f32 %v197, %v197
    %v199 = vadd.f32 %v196, %v198
    %v200 = vadd.f32 %v177, 1e-06
    %v201 = vadd.f32 %v178, 1e-06
    %v202 = vmax.f32 %v200, 0.0
    %v203 = vmax.f32 %v201, 0.0
    %v204 = vmin.f32 %v202, 1.0
    %v205 = vmin.f32 %v203, 1.0
    %v206 = vrsqrt.pop %v204
    %v207 = vmul.f32 %v204, %v206
    %vm208 = vcmp.eq.f32.partialorder %v204, inf
    %v209 = vsel %vm208, %v204, %v207
    %vm210 = vcmp.eq.f32.partialorder %v204, 0.0
    %v211 = vand.u32 %v204, 2147483648
    %v212 = vsel %vm210, %v211, %v209
    %v213 = vrsqrt.pop %v205
    %v214 = vmul.f32 %v205, %v213
    %vm215 = vcmp.eq.f32.partialorder %v205, inf
    %v216 = vsel %vm215, %v205, %v214
    %vm217 = vcmp.eq.f32.partialorder %v205, 0.0
    %v218 = vand.u32 %v205, 2147483648
    %v219 = vsel %vm217, %v218, %v216
    %v220 = vrsqrt.pop %v181
    %v221 = vmul.f32 %v181, %v220
    %vm222 = vcmp.eq.f32.partialorder %v181, inf
    %v223 = vsel %vm222, %v181, %v221
    %vm224 = vcmp.eq.f32.partialorder %v181, 0.0
    %v225 = vand.u32 %v181, 2147483648
    %v226 = vsel %vm224, %v225, %v223
    %v227 = vrsqrt.pop %v182
    %v228 = vmul.f32 %v182, %v227
    %vm229 = vcmp.eq.f32.partialorder %v182, inf
    %v230 = vsel %vm229, %v182, %v228
    %vm231 = vcmp.eq.f32.partialorder %v182, 0.0
    %v232 = vand.u32 %v182, 2147483648
    %v233 = vsel %vm231, %v232, %v230
    %v234 = vsub.f32 %v212, %v226
    %v235 = vmul.f32 %v234, %v234
    %v236 = vsub.f32 %v219, %v233
    %v237 = vmul.f32 %v236, %v236
    %v238 = vadd.f32 %v235, %v237
    %v239 = vadd.f32 %v199, %v238
    %v240 = vmul.f32 %v194, %v239
    %241 = vadd.xlane.f32.xlu0 %v240
    %v242 = vpop.xlane.xlu0 %241
    %v243 = vrot.slane %v242, 4
    %v244 = vadd.f32 %v242, %v243
    %v245 = vrot.slane %v244, 2
    %v246 = vadd.f32 %v244, %v245
    %v247 = vrot.slane %v246, 1
    %v248 = vadd.f32 %v246, %v247
    %s249 = vtos %v248
    %v250 = vmul.f32 %v161, %v53
    %v251 = vmul.f32 %v166, %v51
    %v252 = vadd.f32 %v250, %v251
    %v253 = vmul.f32 %v80, %v252
    %v254 = vmul.f32 %v80, %v80
    %v255 = vsub.f32 %v253, %v254
    %v256 = vmul.f32 %v255, %v255
    %257 = vadd.xlane.f32.xlu0 %v256
    %v258 = vpop.xlane.xlu0 %257
    %v259 = vrot.slane %v258, 4
    %v260 = vadd.f32 %v258, %v259
    %v261 = vrot.slane %v260, 2
    %v262 = vadd.f32 %v260, %v261
    %v263 = vrot.slane %v262, 1
    %v264 = vadd.f32 %v262, %v263
    %s265 = vtos %v264
    %v266 = vsub.f32 1.0, %v80
    %v267 = vmul.f32 %v266, %v51
    %v268 = vmul.f32 %v266, %v80
    %v269 = vsub.f32 %v267, %v268
    %v270 = vmul.f32 %v269, %v269
    %271 = vadd.xlane.f32.xlu0 %v270
    %v272 = vpop.xlane.xlu0 %271
    %v273 = vrot.slane %v272, 4
    %v274 = vadd.f32 %v272, %v273
    %v275 = vrot.slane %v274, 2
    %v276 = vadd.f32 %v274, %v275
    %v277 = vrot.slane %v276, 1
    %v278 = vadd.f32 %v276, %v277
    %s279 = vtos %v278
    %v280 = vmul.f32 %v266, %v53
    %v281 = vsub.f32 %v280, %v268
    %v282 = vmul.f32 %v281, %v281
    %283 = vadd.xlane.f32.xlu0 %v282
    %v284 = vpop.xlane.xlu0 %283
    %v285 = vrot.slane %v284, 4
    %v286 = vadd.f32 %v284, %v285
    %v287 = vrot.slane %v286, 2
    %v288 = vadd.f32 %v286, %v287
    %v289 = vrot.slane %v288, 1
    %v290 = vadd.f32 %v288, %v289
    %s291 = vtos %v290
    %s292 = sadd.f32 %s279, %s291
    %v293 = vmul.f32 %v80, %v54
    %v294 = vmul.f32 %v80, %v55
    %v295 = vmul.f32 %v80, %v56
    %v296 = vmul.f32 %v80, %v57
    %v297 = vmul.f32 %v80, %v58
    %v298 = vmul.f32 %v80, %v59
    %v299 = vmul.f32 %v80, %v60
    %v300 = vmul.f32 %v80, %v61
    %v301 = vmul.f32 %v80, %v62
    %v302 = vmul.f32 %v80, %v63
    %v303 = vmul.f32 %v80, %v64
    %v304 = vmul.f32 %v80, %v65
    %v305 = vmul.f32 %v80, %v66
    %v306 = vmul.f32 %v80, %v67
    %v307 = vmul.f32 %v80, %v68
    %v308 = vmul.f32 %v80, %v69
    %v309 = vmul.f32 %v80, %v70
    %v310 = vmul.f32 %v80, %v71
    %v311 = vmul.f32 %v80, %v72
    %v312 = vmul.f32 %v80, %v73
    %v313 = vmul.f32 %v80, %v81
    %v314 = vmul.f32 %v80, %v82
    %v315 = vmul.f32 %v80, %v83
    %v316 = vmul.f32 %v80, %v84
    %v317 = vmul.f32 %v80, %v85
    %v318 = vmul.f32 %v80, %v86
    %v319 = vmul.f32 %v80, %v87
    %v320 = vmul.f32 %v80, %v88
    %v321 = vmul.f32 %v80, %v89
    %v322 = vmul.f32 %v80, %v90
    %v323 = vmul.f32 %v80, %v91
    %v324 = vmul.f32 %v80, %v92
    %v325 = vmul.f32 %v80, %v93
    %v326 = vmul.f32 %v80, %v94
    %v327 = vmul.f32 %v80, %v95
    %v328 = vmul.f32 %v80, %v96
    %v329 = vmul.f32 %v80, %v97
    %v330 = vmul.f32 %v80, %v98
    %v331 = vmul.f32 %v80, %v99
    %v332 = vmul.f32 %v80, %v100
    %v333 = vsub.f32 %v293, %v313
    %v334 = vsub.f32 %v294, %v314
    %v335 = vsub.f32 %v295, %v315
    %v336 = vsub.f32 %v296, %v316
    %v337 = vsub.f32 %v297, %v317
    %v338 = vsub.f32 %v298, %v318
    %v339 = vsub.f32 %v299, %v319
    %v340 = vsub.f32 %v300, %v320
    %v341 = vsub.f32 %v301, %v321
    %v342 = vsub.f32 %v302, %v322
    %v343 = vsub.f32 %v303, %v323
    %v344 = vsub.f32 %v304, %v324
    %v345 = vsub.f32 %v305, %v325
    %v346 = vsub.f32 %v306, %v326
    %v347 = vsub.f32 %v307, %v327
    %v348 = vsub.f32 %v308, %v328
    %v349 = vsub.f32 %v309, %v329
    %v350 = vsub.f32 %v310, %v330
    %v351 = vsub.f32 %v311, %v331
    %v352 = vsub.f32 %v312, %v332
    %v353 = vmul.f32 %v333, %v333
    %v354 = vmul.f32 %v334, %v334
    %v355 = vmul.f32 %v335, %v335
    %v356 = vmul.f32 %v336, %v336
    %v357 = vmul.f32 %v337, %v337
    %v358 = vmul.f32 %v338, %v338
    %v359 = vmul.f32 %v339, %v339
    %v360 = vmul.f32 %v340, %v340
    %v361 = vmul.f32 %v341, %v341
    %v362 = vmul.f32 %v342, %v342
    %v363 = vmul.f32 %v343, %v343
    %v364 = vmul.f32 %v344, %v344
    %v365 = vmul.f32 %v345, %v345
    %v366 = vmul.f32 %v346, %v346
    %v367 = vmul.f32 %v347, %v347
    %v368 = vmul.f32 %v348, %v348
    %v369 = vmul.f32 %v349, %v349
    %v370 = vmul.f32 %v350, %v350
    %v371 = vmul.f32 %v351, %v351
    %v372 = vmul.f32 %v352, %v352
    %v373 = vadd.f32 %v353, %v354
    %v374 = vadd.f32 %v373, %v355
    %v375 = vadd.f32 %v374, %v356
    %v376 = vadd.f32 %v375, %v357
    %v377 = vadd.f32 %v376, %v358
    %v378 = vadd.f32 %v377, %v359
    %v379 = vadd.f32 %v378, %v360
    %v380 = vadd.f32 %v379, %v361
    %v381 = vadd.f32 %v380, %v362
    %v382 = vadd.f32 %v381, %v363
    %v383 = vadd.f32 %v382, %v364
    %v384 = vadd.f32 %v383, %v365
    %v385 = vadd.f32 %v384, %v366
    %v386 = vadd.f32 %v385, %v367
    %v387 = vadd.f32 %v386, %v368
    %v388 = vadd.f32 %v387, %v369
    %v389 = vadd.f32 %v388, %v370
    %v390 = vadd.f32 %v389, %v371
    %v391 = vadd.f32 %v390, %v372
    %392 = vadd.xlane.f32.xlu0 %v391
    %v393 = vpop.xlane.xlu0 %392
    %v394 = vrot.slane %v393, 4
    %v395 = vadd.f32 %v393, %v394
    %v396 = vrot.slane %v395, 2
    %v397 = vadd.f32 %v395, %v396
    %v398 = vrot.slane %v397, 1
    %v399 = vadd.f32 %v397, %v398
    %s400 = vtos %v399
    %vm401 = vcmp.eq.s32.totalorder %v185, 0
    %v402 = vstv %s249
    %v403 = vsel %vm401, %v402, 0.0
    %vm404 = vcmp.eq.s32.totalorder %v185, 1
    %v405 = vstv %s265
    %v406 = vsel %vm404, %v405, 0.0
    %v407 = vadd.f32 %v403, %v406
    %vm408 = vcmp.eq.s32.totalorder %v185, 2
    %v409 = vstv %s292
    %v410 = vsel %vm408, %v409, 0.0
    %v411 = vadd.f32 %v407, %v410
    %vm412 = vcmp.eq.s32.totalorder %v185, 3
    %v413 = vstv %s400
    %v414 = vsel %vm412, %v413, 0.0
    %v415 = vadd.f32 %v411, %v414
    %416 = vst [vmem:[#allocation7] sm:$0xff] %v415
    // Predicated region
    $region18: #{tpu_custom_call.1} parent=1 // pred_check
      _
    $region19: #{tpu_custom_call.1} parent=1 // pred_check_branch
      %418 = sbr.rel (0) target = $region21
    $region20: #{tpu_custom_call.1} parent=1 // pred_region
      %s420 = ssub.s32 128, 128
      %421 = vsyncadd [#allocation4], %s420
      %s423 = sshll.u32 [#allocation7], 4
      %s424 = int_to_ptr.vmem [resolvable:$true] %s423
      %426 = dma.vmem_to_hbm [thread:$0]  %s424, 128, %s2, [#allocation4]
    $region21: #{tpu_custom_call.1} parent=1 // pred_fallthru
      _
    // Predicated region
    $region22: #{tpu_custom_call.1} parent=1 // pred_check
      _
    $region23: #{tpu_custom_call.1} parent=1 // pred_check_branch
      %428 = sbr.rel (0) target = $region25
    $region24: #{tpu_custom_call.1} parent=1 // pred_region
      %429 = dma.done [#allocation4], 128
    $region25: #{tpu_custom_call.1} parent=1 // pred_fallthru
      _
    %430 = vsyncpa [#allocation3], 1
    %431 = vsyncpa [#allocation6], 1
    %432 = vsyncpa [#allocation4], 1

</llo_original>
